<compile_context>
chip_gen: v6e
topology: v6e:2x2x1
jax: 0.10.0
libtpu: 0.0.40
codegen_flags: <defaults>
</compile_context>

<pallas_src>
import math

import jax
import jax.numpy as jnp
from jax.experimental import pallas as pl
from jax.experimental.pallas import tpu as pltpu


def _offset_scale_kernel(x_ref, gamma_ref, beta_ref, *out_refs):
    # x_ref:     (tile_n, Dk)  input dtype
    # gamma_ref: (H, Dk)       compute dtype, fully resident
    # beta_ref:  (H, Dk)       compute dtype, fully resident
    # out_refs:  H refs, each (tile_n, Dk), output dtype
    compute_dtype = gamma_ref.dtype
    for h, o_ref in enumerate(out_refs):
        g = gamma_ref[pl.ds(h, 1), :]          # (1, Dk), static slice
        b = beta_ref[pl.ds(h, 1), :]           # (1, Dk)
        # One fused load->mul->add->store per head: no shared whole-tile temp,
        # no extra VMEM writes on v5e's single vst slot.
        o_ref[...] = (x_ref[...].astype(compute_dtype) * g + b).astype(o_ref.dtype)


def _device_kind():
    try:
        return jax.devices()[0].device_kind.lower()
    except Exception:
        return ""


def _choose_tile_n(n_rows, dk, in_itemsize, out_itemsize, heads, budget_bytes):
    min_item = min(in_itemsize, out_itemsize)
    row_mult = 8 * max(1, 4 // min_item)       # 8 rows f32, 16 bf16, 32 int8
    if n_rows <= row_mult:
        return n_rows                          # full-extent block is always legal
    # Double-buffered footprint per grid step: x tile + H output tiles.
    bytes_per_row = 2 * dk * (in_itemsize + heads * out_itemsize)
    max_rows = max(row_mult, budget_bytes // max(bytes_per_row, 1))
    tile = max(row_mult, (max_rows // row_mult) * row_mult)
    # Guarantee >= 2 grid steps so both of v7x's TensorCores get work.
    half = max(row_mult, (((n_rows + 1) // 2) // row_mult) * row_mult)
    return min(tile, half)


def offset_scale(x, gamma, beta, *, tile_n=None):
    """x: (..., D). gamma/beta: (H, D). Returns tuple of H arrays shaped like x."""
    heads, dim = gamma.shape
    lead_shape = x.shape[:-1]
    n = 1
    for s in lead_shape:
        n *= s

    kind = _device_kind()
    old_gen = any(v in kind for v in ("v2", "v3", "v4", "v5"))  # no bf16 VALU

    out_dtype = jnp.result_type(x.dtype, gamma.dtype, beta.dtype)
    if out_dtype == jnp.bfloat16 and not old_gen:
        compute_dtype = jnp.bfloat16           # native bf16 VALU on v6e / v7x
    elif jnp.issubdtype(out_dtype, jnp.floating):
        compute_dtype = jnp.float32
    else:
        compute_dtype = out_dtype

    # --- lane-dense last dim: fold rows into lanes, else zero-pad dim to 128 ---
    fold, pad = 1, 0
    if dim % 128 != 0:
        k = 128 // math.gcd(dim, 128)
        if k > 1 and n % k == 0:
            fold = k
        else:
            pad = (-dim) % 128

    if pad:
        x = jnp.pad(x, [(0, 0)] * len(lead_shape) + [(0, pad)])
        gamma = jnp.pad(gamma, [(0, 0), (0, pad)])
        beta = jnp.pad(beta, [(0, 0), (0, pad)])
    dim_p = dim + pad
    n2 = n // fold
    dk = dim_p * fold

    x2d = x.reshape(n2, dk)                                     # contiguous, free
    gamma2 = (jnp.tile(gamma, (1, fold)) if fold > 1 else gamma).astype(compute_dtype)
    beta2 = (jnp.tile(beta, (1, fold)) if fold > 1 else beta).astype(compute_dtype)

    in_itemsize = jnp.dtype(x.dtype).itemsize
    out_itemsize = jnp.dtype(out_dtype).itemsize
    param_itemsize = jnp.dtype(compute_dtype).itemsize

    if ("v6" in kind) or ("v7" in kind):
        budget, vmem_limit = 26 << 20, 34 << 20    # v6e/v7x: 32 MiB scoped default
    else:
        budget, vmem_limit = 12 << 20, None        # v5e: 16 MiB scoped default

    if tile_n is None:
        tile_n = _choose_tile_n(n2, dk, in_itemsize, out_itemsize, heads, budget)
    tile_n = min(tile_n, n2)

    grid = (pl.cdiv(n2, tile_n),)

    out_shapes = tuple(jax.ShapeDtypeStruct((n2, dk), out_dtype) for _ in range(heads))
    out_specs = [pl.BlockSpec((tile_n, dk), lambda i: (i, 0)) for _ in range(heads)]

    cost = pl.CostEstimate(
        flops=2 * heads * n2 * dk,
        transcendentals=0,
        bytes_accessed=n2 * dk * (in_itemsize + heads * out_itemsize)
        + 2 * heads * dk * param_itemsize,
    )

    cp_kwargs = dict(dimension_semantics=("parallel",))
    if vmem_limit is not None:
        cp_kwargs["vmem_limit_bytes"] = vmem_limit

    outs = pl.pallas_call(
        _offset_scale_kernel,
        out_shape=out_shapes,
        grid_spec=pltpu.PrefetchScalarGridSpec(
            num_scalar_prefetch=0,
            grid=grid,
            in_specs=[
                pl.BlockSpec((tile_n, dk), lambda i: (i, 0)),    # x row tile
                pl.BlockSpec((heads, dk), lambda i: (0, 0)),     # gamma, resident
                pl.BlockSpec((heads, dk), lambda i: (0, 0)),     # beta, resident
            ],
            out_specs=out_specs,
        ),
        compiler_params=pltpu.CompilerParams(**cp_kwargs),
        cost_estimate=cost,
    )(x2d, gamma2, beta2)

    # Undo the lane fold (contiguous -> free reshape), strip padding, restore dims.
    results = []
    for o in outs:
        o = o.reshape(lead_shape + (dim_p,))
        if pad:
            o = o[..., :dim]
        results.append(o)
    return tuple(results)


def offset_scale_ref(x, gamma, beta):
    # Pure-JAX reference matching the PyTorch einsum + unbind.
    out = x[..., None, :] * gamma + beta           # (..., H, D)
    return tuple(out[..., h, :] for h in range(gamma.shape[0]))


if __name__ == "__main__":
    key = jax.random.PRNGKey(0)
    k_x, k_g = jax.random.split(key)

    batch, seq, dim, heads = 2, 8, 32, 4

    x = jax.random.normal(k_x, (batch, seq, dim), dtype=jnp.float32)
    # Deterministic init mirroring nn.init.normal_(gamma, std=0.02), beta = zeros.
    gamma = 0.02 * jax.random.normal(k_g, (heads, dim), dtype=jnp.float32)
    beta = jnp.zeros((heads, dim), dtype=jnp.float32)

    outs = offset_scale(x, gamma, beta)
    outs = jax.block_until_ready(outs)

    refs = offset_scale_ref(x, gamma, beta)
    assert len(outs) == heads
    for o, r in zip(outs, refs):
        assert o.shape == (batch, seq, dim)
        assert jnp.allclose(o, r, atol=1e-6, rtol=1e-6)

    print("KERNEL_OK")
</pallas_src>

<mosaic_0001>
module attributes {stable_mosaic.version = 11 : i64} {
  func.func @_offset_scale_kernel(%arg0: i32, %arg1: memref<4x128xf32, #tpu.memory_space<vmem>>, %arg2: memref<4x128xf32, #tpu.memory_space<vmem>>, %arg3: memref<4x128xf32, #tpu.memory_space<vmem>>, %arg4: memref<4x128xf32, #tpu.memory_space<vmem>>, %arg5: memref<4x128xf32, #tpu.memory_space<vmem>>, %arg6: memref<4x128xf32, #tpu.memory_space<vmem>>, %arg7: memref<4x128xf32, #tpu.memory_space<vmem>>) attributes {dimension_semantics = [#tpu.dimension_semantics<parallel>], iteration_bounds = array<i64: 1>, scalar_prefetch = 0 : i64, scratch_operands = 0 : i64, tpu.core_type = #tpu.core_type<tc>, window_params = [{transform_indices = @transform_0, window_bounds = array<i64: 4, 128>}, {pipeline_mode = #tpu.pipeline_mode<synchronous>, transform_indices = @transform_1, window_bounds = array<i64: 4, 128>}, {pipeline_mode = #tpu.pipeline_mode<synchronous>, transform_indices = @transform_2, window_bounds = array<i64: 4, 128>}, {transform_indices = @transform_3, window_bounds = array<i64: 4, 128>}, {transform_indices = @transform_4, window_bounds = array<i64: 4, 128>}, {transform_indices = @transform_5, window_bounds = array<i64: 4, 128>}, {transform_indices = @transform_6, window_bounds = array<i64: 4, 128>}]} {
    %c0 = arith.constant 0 : index
    %c0_0 = arith.constant 0 : index
    %0 = vector.load %arg2[%c0, %c0_0] : memref<4x128xf32, #tpu.memory_space<vmem>>, vector<1x128xf32>
    %c0_1 = arith.constant 0 : index
    %c0_2 = arith.constant 0 : index
    %1 = vector.load %arg3[%c0_1, %c0_2] : memref<4x128xf32, #tpu.memory_space<vmem>>, vector<1x128xf32>
    %c0_3 = arith.constant 0 : index
    %c0_4 = arith.constant 0 : index
    %2 = vector.load %arg1[%c0_3, %c0_4] : memref<4x128xf32, #tpu.memory_space<vmem>>, vector<4x128xf32>
    %3 = vector.broadcast %0 : vector<1x128xf32> to vector<4x128xf32>
    %4 = arith.mulf %2, %3 : vector<4x128xf32>
    %5 = vector.broadcast %1 : vector<1x128xf32> to vector<4x128xf32>
    %6 = arith.addf %4, %5 : vector<4x128xf32>
    %c0_5 = arith.constant 0 : index
    %c0_6 = arith.constant 0 : index
    %7 = vector.load %arg4[%c0_5, %c0_6] : memref<4x128xf32, #tpu.memory_space<vmem>>, vector<4x128xf32>
    tpu.vector_store %arg4[%c0_5, %c0_6], %6 {strides = array<i32>} : memref<4x128xf32, #tpu.memory_space<vmem>>, vector<4x128xf32>,
    %c1 = arith.constant 1 : index
    %c0_7 = arith.constant 0 : index
    %8 = vector.load %arg2[%c1, %c0_7] : memref<4x128xf32, #tpu.memory_space<vmem>>, vector<1x128xf32>
    %c1_8 = arith.constant 1 : index
    %c0_9 = arith.constant 0 : index
    %9 = vector.load %arg3[%c1_8, %c0_9] : memref<4x128xf32, #tpu.memory_space<vmem>>, vector<1x128xf32>
    %c0_10 = arith.constant 0 : index
    %c0_11 = arith.constant 0 : index
    %10 = vector.load %arg1[%c0_10, %c0_11] : memref<4x128xf32, #tpu.memory_space<vmem>>, vector<4x128xf32>
    %11 = vector.broadcast %8 : vector<1x128xf32> to vector<4x128xf32>
    %12 = arith.mulf %10, %11 : vector<4x128xf32>
    %13 = vector.broadcast %9 : vector<1x128xf32> to vector<4x128xf32>
    %14 = arith.addf %12, %13 : vector<4x128xf32>
    %c0_12 = arith.constant 0 : index
    %c0_13 = arith.constant 0 : index
    %15 = vector.load %arg5[%c0_12, %c0_13] : memref<4x128xf32, #tpu.memory_space<vmem>>, vector<4x128xf32>
    tpu.vector_store %arg5[%c0_12, %c0_13], %14 {strides = array<i32>} : memref<4x128xf32, #tpu.memory_space<vmem>>, vector<4x128xf32>,
    %c2 = arith.constant 2 : index
    %c0_14 = arith.constant 0 : index
    %16 = vector.load %arg2[%c2, %c0_14] : memref<4x128xf32, #tpu.memory_space<vmem>>, vector<1x128xf32>
    %c2_15 = arith.constant 2 : index
    %c0_16 = arith.constant 0 : index
    %17 = vector.load %arg3[%c2_15, %c0_16] : memref<4x128xf32, #tpu.memory_space<vmem>>, vector<1x128xf32>
    %c0_17 = arith.constant 0 : index
    %c0_18 = arith.constant 0 : index
    %18 = vector.load %arg1[%c0_17, %c0_18] : memref<4x128xf32, #tpu.memory_space<vmem>>, vector<4x128xf32>
    %19 = vector.broadcast %16 : vector<1x128xf32> to vector<4x128xf32>
    %20 = arith.mulf %18, %19 : vector<4x128xf32>
    %21 = vector.broadcast %17 : vector<1x128xf32> to vector<4x128xf32>
    %22 = arith.addf %20, %21 : vector<4x128xf32>
    %c0_19 = arith.constant 0 : index
    %c0_20 = arith.constant 0 : index
    %23 = vector.load %arg6[%c0_19, %c0_20] : memref<4x128xf32, #tpu.memory_space<vmem>>, vector<4x128xf32>
    tpu.vector_store %arg6[%c0_19, %c0_20], %22 {strides = array<i32>} : memref<4x128xf32, #tpu.memory_space<vmem>>, vector<4x128xf32>,
    %c3 = arith.constant 3 : index
    %c0_21 = arith.constant 0 : index
    %24 = vector.load %arg2[%c3, %c0_21] : memref<4x128xf32, #tpu.memory_space<vmem>>, vector<1x128xf32>
    %c3_22 = arith.constant 3 : index
    %c0_23 = arith.constant 0 : index
    %25 = vector.load %arg3[%c3_22, %c0_23] : memref<4x128xf32, #tpu.memory_space<vmem>>, vector<1x128xf32>
    %c0_24 = arith.constant 0 : index
    %c0_25 = arith.constant 0 : index
    %26 = vector.load %arg1[%c0_24, %c0_25] : memref<4x128xf32, #tpu.memory_space<vmem>>, vector<4x128xf32>
    %27 = vector.broadcast %24 : vector<1x128xf32> to vector<4x128xf32>
    %28 = arith.mulf %26, %27 : vector<4x128xf32>
    %29 = vector.broadcast %25 : vector<1x128xf32> to vector<4x128xf32>
    %30 = arith.addf %28, %29 : vector<4x128xf32>
    %c0_26 = arith.constant 0 : index
    %c0_27 = arith.constant 0 : index
    %31 = vector.load %arg7[%c0_26, %c0_27] : memref<4x128xf32, #tpu.memory_space<vmem>>, vector<4x128xf32>
    tpu.vector_store %arg7[%c0_26, %c0_27], %30 {strides = array<i32>} : memref<4x128xf32, #tpu.memory_space<vmem>>, vector<4x128xf32>,
    return
  }
  func.func @transform_0(%arg0: i32) -> (i32, i32) {
    %c0_i32 = arith.constant 0 : i32
    %c0_i32_0 = arith.constant 0 : i32
    return %arg0, %c0_i32 : i32, i32
  }
  func.func @transform_1(%arg0: i32) -> (i32, i32) {
    %c0_i32 = arith.constant 0 : i32
    %c0_i32_0 = arith.constant 0 : i32
    %c0_i32_1 = arith.constant 0 : i32
    return %c0_i32, %c0_i32_0 : i32, i32
  }
  func.func @transform_2(%arg0: i32) -> (i32, i32) {
    %c0_i32 = arith.constant 0 : i32
    %c0_i32_0 = arith.constant 0 : i32
    %c0_i32_1 = arith.constant 0 : i32
    return %c0_i32, %c0_i32_0 : i32, i32
  }
  func.func @transform_3(%arg0: i32) -> (i32, i32) {
    %c0_i32 = arith.constant 0 : i32
    %c0_i32_0 = arith.constant 0 : i32
    return %arg0, %c0_i32 : i32, i32
  }
  func.func @transform_4(%arg0: i32) -> (i32, i32) {
    %c0_i32 = arith.constant 0 : i32
    %c0_i32_0 = arith.constant 0 : i32
    return %arg0, %c0_i32 : i32, i32
  }
  func.func @transform_5(%arg0: i32) -> (i32, i32) {
    %c0_i32 = arith.constant 0 : i32
    %c0_i32_0 = arith.constant 0 : i32
    return %arg0, %c0_i32 : i32, i32
  }
  func.func @transform_6(%arg0: i32) -> (i32, i32) {
    %c0_i32 = arith.constant 0 : i32
    %c0_i32_0 = arith.constant 0 : i32
    return %arg0, %c0_i32 : i32, i32
  }
}

</mosaic_0001>

<llo_original>
// kernel: tpu_custom_call.1
$region0: #{tpu_custom_call.1}
  #allocation0 [shape = 'u32[]', space=smem, size = 0x4, offset = 0x4, fixed_abs, tag = 'smem constant byte address 0x4 - core index']
  #allocation1 [shape = 'u32[144,128]{1,0:T(1,128)}', space=vmem, size = 0x12000, scoped, tag = 'internal scratch']
  %s0 = inlined_call_operand.hbm [shape: f32[4,128], index: 0, kind: input, shape index: {}]
  %s1 = inlined_call_operand.hbm [shape: f32[4,128], index: 1, kind: input, shape index: {}]
  %s2 = inlined_call_operand.hbm [shape: f32[4,128], index: 2, kind: input, shape index: {}]
  %s3 = inlined_call_operand.hbm [shape: f32[4,128], index: 3, kind: output, shape index: {0}]
  %s4 = inlined_call_operand.hbm [shape: f32[4,128], index: 4, kind: output, shape index: {1}]
  %s5 = inlined_call_operand.hbm [shape: f32[4,128], index: 5, kind: output, shape index: {2}]
  %s6 = inlined_call_operand.hbm [shape: f32[4,128], index: 6, kind: output, shape index: {3}]
  %7 = xla_tuple %s3, %s4, %s5, %s6
  %s8 = sld [smem:[#allocation0]]
  $region58: #{tpu_custom_call.1} parent=0
    _
  %s10 = ssub.s32 1, %s8
  %s11 = scalar_select 0, %s10, %s8
  $region1: #{tpu_custom_call.1} parent=0
    #allocation2 [shape = 'u8[2048]{0}', space=vmem, size = 0x800, scoped, tag = 'input window, operand 0, single buffered']
    #allocation3 [shape = 's32[1]{0}', space=sflag, size = 0x4, scoped, tag = 'scoped memory for tpu_custom_call.1']
    #allocation4 [shape = 's32[1]{0}', space=sflag, size = 0x4, scoped, tag = 'scoped memory for tpu_custom_call.1']
    #allocation5 [shape = 'u8[2048]{0}', space=vmem, size = 0x800, scoped, tag = 'input window, operand 1, single buffered']
    #allocation6 [shape = 's32[1]{0}', space=sflag, size = 0x4, scoped, tag = 'scoped memory for tpu_custom_call.1']
    #allocation7 [shape = 'u8[2048]{0}', space=vmem, size = 0x800, scoped, tag = 'input window, operand 2, single buffered']
    #allocation8 [shape = 'u8[2048]{0}', space=vmem, size = 0x800, scoped, tag = 'output window, operand 0, single buffered']
    #allocation9 [shape = 'u8[2048]{0}', space=vmem, size = 0x800, scoped, tag = 'output window, operand 1, single buffered']
    #allocation10 [shape = 's32[1]{0}', space=sflag, size = 0x4, scoped, tag = 'scoped memory for tpu_custom_call.1']
    #allocation11 [shape = 'u8[2048]{0}', space=vmem, size = 0x800, scoped, tag = 'output window, operand 2, single buffered']
    #allocation12 [shape = 'u8[2048]{0}', space=vmem, size = 0x800, scoped, tag = 'output window, operand 3, single buffered']
    #allocation13 [shape = 's32[1]{0}', space=sflag, size = 0x4, scoped, tag = 'scoped memory for tpu_custom_call.1']
    %12 = vsyncpa [#allocation3], 0
    %13 = vsyncpa [#allocation6], 0
    %14 = vsyncpa [#allocation4], 0
    %15 = vsyncpa [#allocation10], 0
    %16 = vsyncpa [#allocation13], 0
    // Predicated region
    $region2: #{tpu_custom_call.1} parent=1 // pred_check
      _
    $region3: #{tpu_custom_call.1} parent=1 // pred_check_branch
      %18 = sbr.rel (0) target = $region5
    $region4: #{tpu_custom_call.1} parent=1 // pred_region
      %s20 = ssub.s32 64, 64
      %21 = vsyncadd [#allocation3], %s20
      %s23 = sshll.u32 [#allocation2], 4
      %s24 = int_to_ptr.vmem [resolvable:$true] %s23
      %26 = dma.hbm_to_vmem [thread:$0]  %s0, 64, %s24, [#allocation3]
    $region5: #{tpu_custom_call.1} parent=1 // pred_fallthru
      _
    // Predicated region
    $region6: #{tpu_custom_call.1} parent=1 // pred_check
      _
    $region7: #{tpu_custom_call.1} parent=1 // pred_check_branch
      %28 = sbr.rel (0) target = $region9
    $region8: #{tpu_custom_call.1} parent=1 // pred_region
      %s30 = ssub.s32 64, 64
      %31 = vsyncadd [#allocation6], %s30
      %s33 = sshll.u32 [#allocation5], 4
      %s34 = int_to_ptr.vmem [resolvable:$true] %s33
      %36 = dma.hbm_to_vmem [thread:$0]  %s1, 64, %s34, [#allocation6]
    $region9: #{tpu_custom_call.1} parent=1 // pred_fallthru
      _
    // Predicated region
    $region10: #{tpu_custom_call.1} parent=1 // pred_check
      _
    $region11: #{tpu_custom_call.1} parent=1 // pred_check_branch
      %38 = sbr.rel (0) target = $region13
    $region12: #{tpu_custom_call.1} parent=1 // pred_region
      %s40 = ssub.s32 64, 64
      %41 = vsyncadd [#allocation6], %s40
      %s43 = sshll.u32 [#allocation7], 4
      %s44 = int_to_ptr.vmem [resolvable:$true] %s43
      %46 = dma.hbm_to_vmem [thread:$0]  %s2, 64, %s44, [#allocation6]
    $region13: #{tpu_custom_call.1} parent=1 // pred_fallthru
      _
    // Predicated region
    $region14: #{tpu_custom_call.1} parent=1 // pred_check
      _
    $region15: #{tpu_custom_call.1} parent=1 // pred_check_branch
      %48 = sbr.rel (0) target = $region17
    $region16: #{tpu_custom_call.1} parent=1 // pred_region
      %49 = dma.done [#allocation3], 64
    $region17: #{tpu_custom_call.1} parent=1 // pred_fallthru
      _
    // Predicated region
    $region18: #{tpu_custom_call.1} parent=1 // pred_check
      _
    $region19: #{tpu_custom_call.1} parent=1 // pred_check_branch
      %51 = sbr.rel (0) target = $region21
    $region20: #{tpu_custom_call.1} parent=1 // pred_region
      %52 = dma.done [#allocation6], 64
    $region21: #{tpu_custom_call.1} parent=1 // pred_fallthru
      _
    // Predicated region
    $region22: #{tpu_custom_call.1} parent=1 // pred_check
      _
    $region23: #{tpu_custom_call.1} parent=1 // pred_check_branch
      %54 = sbr.rel (0) target = $region25
    $region24: #{tpu_custom_call.1} parent=1 // pred_region
      %55 = dma.done [#allocation6], 64
    $region25: #{tpu_custom_call.1} parent=1 // pred_fallthru
      _
    %v56 = vld [vmem:[#allocation5] sm:$0x1]
    %v57 = vld [vmem:[#allocation7] sm:$0x1]
    %v58 = vld [vmem:[#allocation2] sm:$0xf]
    %v59 = vlaneseq
    %v60 = vshrl.u32 %v59, 7
    %v61 = vsub.s32 0, %v60
    %v62 = vrot.slane %v56, %v61
    %v63 = vmul.f32 %v58, %v62
    %v64 = vlaneseq
    %v65 = vshrl.u32 %v64, 7
    %v66 = vsub.s32 0, %v65
    %v67 = vrot.slane %v57, %v66
    %v68 = vadd.f32 %v63, %v67
    %69 = vst [vmem:[#allocation8] sm:$0xf] %v68
    %v70 = vld [vmem:[#allocation5 + $0x1] sm:$0x1]
    %v71 = vld [vmem:[#allocation7 + $0x1] sm:$0x1]
    %v72 = vld [vmem:[#allocation2] sm:$0xf]
    %v73 = vlaneseq
    %v74 = vshrl.u32 %v73, 7
    %v75 = vsub.s32 0, %v74
    %v76 = vrot.slane %v70, %v75
    %v77 = vmul.f32 %v72, %v76
    %v78 = vlaneseq
    %v79 = vshrl.u32 %v78, 7
    %v80 = vsub.s32 0, %v79
    %v81 = vrot.slane %v71, %v80
    %v82 = vadd.f32 %v77, %v81
    %83 = vst [vmem:[#allocation9] sm:$0xf] %v82
    %v84 = vld [vmem:[#allocation5 + $0x2] sm:$0x1]
    %v85 = vld [vmem:[#allocation7 + $0x2] sm:$0x1]
    %v86 = vld [vmem:[#allocation2] sm:$0xf]
    %v87 = vlaneseq
    %v88 = vshrl.u32 %v87, 7
    %v89 = vsub.s32 0, %v88
    %v90 = vrot.slane %v84, %v89
    %v91 = vmul.f32 %v86, %v90
    %v92 = vlaneseq
    %v93 = vshrl.u32 %v92, 7
    %v94 = vsub.s32 0, %v93
    %v95 = vrot.slane %v85, %v94
    %v96 = vadd.f32 %v91, %v95
    %97 = vst [vmem:[#allocation11] sm:$0xf] %v96
    %v98 = vld [vmem:[#allocation5 + $0x3] sm:$0x1]
    %v99 = vld [vmem:[#allocation7 + $0x3] sm:$0x1]
    %v100 = vld [vmem:[#allocation2] sm:$0xf]
    %v101 = vlaneseq
    %v102 = vshrl.u32 %v101, 7
    %v103 = vsub.s32 0, %v102
    %v104 = vrot.slane %v98, %v103
    %v105 = vmul.f32 %v100, %v104
    %v106 = vlaneseq
    %v107 = vshrl.u32 %v106, 7
    %v108 = vsub.s32 0, %v107
    %v109 = vrot.slane %v99, %v108
    %v110 = vadd.f32 %v105, %v109
    %111 = vst [vmem:[#allocation12] sm:$0xf] %v110
    // Predicated region
    $region26: #{tpu_custom_call.1} parent=1 // pred_check
      _
    $region27: #{tpu_custom_call.1} parent=1 // pred_check_branch
      %113 = sbr.rel (0) target = $region29
    $region28: #{tpu_custom_call.1} parent=1 // pred_region
      %s115 = ssub.s32 64, 64
      %116 = vsyncadd [#allocation4], %s115
      %s118 = sshll.u32 [#allocation8], 4
      %s119 = int_to_ptr.vmem [resolvable:$true] %s118
      %121 = dma.vmem_to_hbm [thread:$0]  %s119, 64, %s3, [#allocation4]
    $region29: #{tpu_custom_call.1} parent=1 // pred_fallthru
      _
    // Predicated region
    $region30: #{tpu_custom_call.1} parent=1 // pred_check
      _
    $region31: #{tpu_custom_call.1} parent=1 // pred_check_branch
      %123 = sbr.rel (0) target = $region33
    $region32: #{tpu_custom_call.1} parent=1 // pred_region
      %s125 = ssub.s32 64, 64
      %126 = vsyncadd [#allocation10], %s125
      %s128 = sshll.u32 [#allocation9], 4
      %s129 = int_to_ptr.vmem [resolvable:$true] %s128
      %131 = dma.vmem_to_hbm [thread:$0]  %s129, 64, %s4, [#allocation10]
    $region33: #{tpu_custom_call.1} parent=1 // pred_fallthru
      _
    // Predicated region
    $region34: #{tpu_custom_call.1} parent=1 // pred_check
      _
    $region35: #{tpu_custom_call.1} parent=1 // pred_check_branch
      %133 = sbr.rel (0) target = $region37
    $region36: #{tpu_custom_call.1} parent=1 // pred_region
      %s135 = ssub.s32 64, 64
      %136 = vsyncadd [#allocation10], %s135
      %s138 = sshll.u32 [#allocation11], 4
      %s139 = int_to_ptr.vmem [resolvable:$true] %s138
      %141 = dma.vmem_to_hbm [thread:$0]  %s139, 64, %s5, [#allocation10]
    $region37: #{tpu_custom_call.1} parent=1 // pred_fallthru
      _
    // Predicated region
    $region38: #{tpu_custom_call.1} parent=1 // pred_check
      _
    $region39: #{tpu_custom_call.1} parent=1 // pred_check_branch
      %143 = sbr.rel (0) target = $region41
    $region40: #{tpu_custom_call.1} parent=1 // pred_region
      %s145 = ssub.s32 64, 64
      %146 = vsyncadd [#allocation13], %s145
      %s148 = sshll.u32 [#allocation12], 4
      %s149 = int_to_ptr.vmem [resolvable:$true] %s148
      %151 = dma.vmem_to_hbm [thread:$0]  %s149, 64, %s6, [#allocation13]
    $region41: #{tpu_custom_call.1} parent=1 // pred_fallthru
      _
    // Predicated region
    $region42: #{tpu_custom_call.1} parent=1 // pred_check
      _
    $region43: #{tpu_custom_call.1} parent=1 // pred_check_branch
      %153 = sbr.rel (0) target = $region45
    $region44: #{tpu_custom_call.1} parent=1 // pred_region
      %154 = dma.done [#allocation4], 64
    $region45: #{tpu_custom_call.1} parent=1 // pred_fallthru
      _
    // Predicated region
    $region46: #{tpu_custom_call.1} parent=1 // pred_check
      _
    $region47: #{tpu_custom_call.1} parent=1 // pred_check_branch
      %156 = sbr.rel (0) target = $region49
    $region48: #{tpu_custom_call.1} parent=1 // pred_region
      %157 = dma.done [#allocation10], 64
    $region49: #{tpu_custom_call.1} parent=1 // pred_fallthru
      _
    // Predicated region
    $region50: #{tpu_custom_call.1} parent=1 // pred_check
      _
    $region51: #{tpu_custom_call.1} parent=1 // pred_check_branch
      %159 = sbr.rel (0) target = $region53
    $region52: #{tpu_custom_call.1} parent=1 // pred_region
      %160 = dma.done [#allocation10], 64
    $region53: #{tpu_custom_call.1} parent=1 // pred_fallthru
      _
    // Predicated region
    $region54: #{tpu_custom_call.1} parent=1 // pred_check
      _
    $region55: #{tpu_custom_call.1} parent=1 // pred_check_branch
      %162 = sbr.rel (0) target = $region57
    $region56: #{tpu_custom_call.1} parent=1 // pred_region
      %163 = dma.done [#allocation13], 64
    $region57: #{tpu_custom_call.1} parent=1 // pred_fallthru
      _
    %164 = vsyncpa [#allocation3], 1
    %165 = vsyncpa [#allocation6], 1
    %166 = vsyncpa [#allocation4], 1
    %167 = vsyncpa [#allocation10], 1
    %168 = vsyncpa [#allocation13], 1

</llo_original>
